<compile_context>
chip_gen: v6e
topology: v6e:2x2x1
jax: 0.10.0
libtpu: 0.0.40
codegen_flags: <defaults>
</compile_context>

<pallas_src>
import functools
import math

import jax
import jax.numpy as jnp
from jax.experimental import pallas as pl
from jax.experimental.pallas import tpu as pltpu


RANK_PAD = 128  # pad LoRA rank to a full lane width (zero padding -> exact)


# ----------------------------------------------------------------------------
# Hardware-aware sizing
# ----------------------------------------------------------------------------
def _vmem_capacity_bytes():
    try:
        info = pltpu.get_tpu_info()
        cap = getattr(info, "vmem_capacity_bytes", None)
        if cap:
            return int(cap)
    except Exception:
        pass
    return 64 * 1024 * 1024  # conservative default (v7x-sized VMEM)


def _vmem_limit_bytes():
    cap = _vmem_capacity_bytes()
    if cap >= 96 * 1024 * 1024:
        # v5e / v6e: 128 MiB physical VMEM; scoped default (16/32 MiB) is far
        # too small, so an explicit large limit is mandatory.
        return 96 * 1024 * 1024
    # v7x: 64 MiB physical; leave headroom for compiler-internal scratch.
    return min(52 * 1024 * 1024, (cap * 13) // 16)


def _pick_lora_row_tile(N, H, itemsize, rank_pad, vmem_limit, row_tile=None):
    if row_tile is None:
        # Budget: 4 weight slabs (worst case double-buffered) + 4 row streams
        # (k, v, ok, ov) double-buffered + compiler slack.
        weight_bytes = 2 * 4 * H * rank_pad * itemsize
        stream_budget = max(vmem_limit - weight_bytes - (4 << 20), 8 << 20)
        row_tile = int(stream_budget // (8 * H * itemsize))
        row_tile = max(64, min(1024, row_tile))
    tn = min(row_tile, N)
    if tn >= 16:
        tn = (tn // 16) * 16          # bf16 packs 2 rows per sublane
    if tn <= 0 or (tn != N and tn % 8 != 0):
        tn = N                        # fall back to one full block
    if tn == N and N >= 32:
        # Keep >= 2 grid steps so ("parallel",) can shard across v7x's 2 TCs.
        half = ((N // 2 + 15) // 16) * 16
        if 0 < half < N:
            tn = half
    return tn


# ----------------------------------------------------------------------------
# Pallas kernels
# ----------------------------------------------------------------------------
def _lora_kv_kernel(rank_ref, scale_ref, k_ref, v_ref, ka_ref, kb_ref,
                    va_ref, vb_ref, ok_ref, ov_ref):
    """Fused keys+values LoRA: out = x + scale * ((x @ A) @ B); dropout p=0."""
    del rank_ref  # the rank index is consumed only by the weight index_maps
    scale = scale_ref[0]
    k = k_ref[...]
    v = v_ref[...]
    # First matmul: [TN, H] @ [H, 128] -> f32 accumulate on the MXU.
    k_mid = jnp.dot(k, ka_ref[...], preferred_element_type=jnp.float32)
    v_mid = jnp.dot(v, va_ref[...], preferred_element_type=jnp.float32)
    # Second matmul: [TN, 128] @ [128, H] -> f32.
    k_delta = jnp.dot(k_mid.astype(kb_ref.dtype), kb_ref[...],
                      preferred_element_type=jnp.float32)
    v_delta = jnp.dot(v_mid.astype(vb_ref.dtype), vb_ref[...],
                      preferred_element_type=jnp.float32)
    # Scale applied in f32 to the delta; residual add in the I/O dtype.
    ok_ref[...] = k + (scale * k_delta).astype(ok_ref.dtype)
    ov_ref[...] = v + (scale * v_delta).astype(ov_ref.dtype)


def _keys_mean_kernel(k_ref, out_ref, acc_ref, *, seq_len, seq_tile):
    """Streaming mean of keys over the sequence axis: [B, S, H] -> [B, H] f32."""
    s = pl.program_id(0)

    @pl.when(s == 0)
    def _():
        acc_ref[...] = jnp.zeros_like(acc_ref)

    x = k_ref[...].astype(jnp.float32)
    pos = jax.lax.broadcasted_iota(jnp.int32, x.shape, 1) + s * seq_tile
    x = jnp.where(pos < seq_len, x, 0.0)      # mask ragged seq boundary
    acc_ref[...] += jnp.sum(x, axis=1)

    @pl.when(s == pl.num_programs(0) - 1)
    def _():
        out_ref[...] = acc_ref[...] * (1.0 / seq_len)


def _importance_mlp_kernel(xm_ref, w1_ref, b1_ref, w2t_ref, b2_ref, out_ref,
                           acc_ref, *, hh_total, hh_tile):
    """attention_proj: Linear(H, H//2) -> ReLU -> Linear(H//2, 1) -> Sigmoid.

    Tiled over the hidden//2 axis (w1 column tiles); the width-1 second linear
    is a VPU multiply + lane reduction accumulated across tiles.
    """
    j = pl.program_id(0)

    @pl.when(j == 0)
    def _():
        acc_ref[...] = jnp.zeros_like(acc_ref)

    h = jnp.dot(xm_ref[...], w1_ref[...], preferred_element_type=jnp.float32)
    h = jnp.maximum(h + b1_ref[...], 0.0)
    contrib = h * w2t_ref[...]
    col = jax.lax.broadcasted_iota(jnp.int32, contrib.shape, 1) + j * hh_tile
    contrib = jnp.where(col < hh_total, contrib, 0.0)   # mask ragged Hh tile
    acc_ref[...] += jnp.sum(contrib, axis=-1, keepdims=True)

    @pl.when(j == pl.num_programs(0) - 1)
    def _():
        out_ref[...] = jax.nn.sigmoid(acc_ref[...] + b2_ref[0])


# ----------------------------------------------------------------------------
# Pallas wrappers
# ----------------------------------------------------------------------------
def lora_kv_apply(rank_idx, scale, keys_flat, vals_flat,
                  key_A, key_B, val_A, val_B, *, row_tile=None):
    """Fused LoRA for keys and values.

    keys_flat/vals_flat: [N, H]
    key_A/val_A:         [num_ranks, H, RANK_PAD]   (zero-padded, stacked)
    key_B/val_B:         [num_ranks, RANK_PAD, H]
    rank_idx:            int32 [1]   (scalar-prefetched -> weight index_maps)
    scale:               float32 [1] (SMEM; applied in-kernel in f32)
    """
    N, H = keys_flat.shape
    _, _, RP = key_A.shape
    itemsize = jnp.dtype(keys_flat.dtype).itemsize
    vmem_limit = _vmem_limit_bytes()
    tn = _pick_lora_row_tile(N, H, itemsize, RP, vmem_limit, row_tile)
    grid = (pl.cdiv(N, tn),)

    row_spec = pl.BlockSpec((tn, H), lambda i, r: (i, 0))
    scale_spec = pl.BlockSpec(memory_space=pltpu.MemorySpace.SMEM)
    out_shape = (jax.ShapeDtypeStruct((N, H), keys_flat.dtype),
                 jax.ShapeDtypeStruct((N, H), vals_flat.dtype))

    def build(weight_mode):
        wkw = {} if weight_mode is None else {"pipeline_mode": weight_mode}
        a_spec = pl.BlockSpec((None, H, RP), lambda i, r: (r[0], 0, 0), **wkw)
        b_spec = pl.BlockSpec((None, RP, H), lambda i, r: (r[0], 0, 0), **wkw)
        return pl.pallas_call(
            _lora_kv_kernel,
            out_shape=out_shape,
            grid_spec=pltpu.PrefetchScalarGridSpec(
                num_scalar_prefetch=1,
                grid=grid,
                in_specs=[scale_spec, row_spec, row_spec,
                          a_spec, b_spec, a_spec, b_spec],
                out_specs=(row_spec, row_spec),
            ),
            compiler_params=pltpu.CompilerParams(
                dimension_semantics=("parallel",),
                vmem_limit_bytes=vmem_limit,
            ),
        )

    args = (rank_idx, scale, keys_flat, vals_flat, key_A, key_B, val_A, val_B)
    try:
        # Weight slabs are grid-invariant -> single-buffer them to free VMEM
        # for bigger row tiles (the biggest lever on v7x's 64 MiB budget).
        return build(pl.Buffered(1))(*args)
    except Exception:
        # pipeline_mode / single-buffering not available on this jax version.
        return build(None)(*args)


def keys_mean(keys, *, seq_tile=None):
    """Streaming seq-mean of keys in Pallas (no f32 copy of keys in HBM)."""
    B, S, H = keys.shape
    itemsize = jnp.dtype(keys.dtype).itemsize
    if seq_tile is None:
        # Keep each streamed block around <= 8 MiB per buffer.
        seq_tile = max(8, min(512, (8 << 20) // max(1, B * H * itemsize)))
    ts = min(seq_tile, S)
    if ts != S:
        ts = max(8, (ts // 8) * 8)
    grid = (pl.cdiv(S, ts),)
    kernel = functools.partial(_keys_mean_kernel, seq_len=S, seq_tile=ts)
    return pl.pallas_call(
        kernel,
        out_shape=jax.ShapeDtypeStruct((B, H), jnp.float32),
        grid_spec=pltpu.PrefetchScalarGridSpec(
            num_scalar_prefetch=0,
            grid=grid,
            in_specs=[pl.BlockSpec((B, ts, H), lambda s: (0, s, 0))],
            out_specs=pl.BlockSpec((B, H), lambda s: (0, 0)),
            scratch_shapes=[pltpu.VMEM((B, H), jnp.float32)],
        ),
        compiler_params=pltpu.CompilerParams(
            dimension_semantics=("arbitrary",),
            vmem_limit_bytes=_vmem_limit_bytes(),
        ),
    )(keys)


def importance_apply(xm, w1, b1, w2t, b2, *, hh_tile=512):
    """xm: [B, H] f32 -> importance [B, 1] f32 (Hh-tiled MLP)."""
    Bsz, H = xm.shape
    Hh = w1.shape[1]
    if Hh <= hh_tile:
        thh = Hh
    else:
        thh = max(128, (hh_tile // 128) * 128)
    grid = (pl.cdiv(Hh, thh),)
    kernel = functools.partial(_importance_mlp_kernel, hh_total=Hh, hh_tile=thh)
    return pl.pallas_call(
        kernel,
        out_shape=jax.ShapeDtypeStruct((Bsz, 1), jnp.float32),
        grid_spec=pltpu.PrefetchScalarGridSpec(
            num_scalar_prefetch=0,
            grid=grid,
            in_specs=[
                pl.BlockSpec((Bsz, H), lambda j: (0, 0)),
                pl.BlockSpec((H, thh), lambda j: (0, j)),
                pl.BlockSpec((1, thh), lambda j: (0, j)),
                pl.BlockSpec((1, thh), lambda j: (0, j)),
                pl.BlockSpec(memory_space=pltpu.MemorySpace.SMEM),  # b2 scalar
            ],
            out_specs=pl.BlockSpec((Bsz, 1), lambda j: (0, 0)),
            scratch_shapes=[pltpu.VMEM((Bsz, 1), jnp.float32)],
        ),
        compiler_params=pltpu.CompilerParams(
            dimension_semantics=("arbitrary",),
            vmem_limit_bytes=_vmem_limit_bytes(),
        ),
    )(xm, w1, b1, w2t, b2)


# ----------------------------------------------------------------------------
# Parameter construction (deterministic, in-script)
# ----------------------------------------------------------------------------
def make_params(key, hidden_size, ranks, r_pad=RANK_PAD):
    """Shapes mirror LoRAPlusCompressor.__init__.

    NOTE: the module zero-inits every lora_B (all deltas would be identically
    zero); small deterministic non-zero values are used instead so the kernel
    compute path is exercised.  Forward-graph semantics are unchanged.
    """
    params = {}
    ks = jax.random.split(key, 4 * len(ranks) + 4)
    i = 0
    kA, kB, vA, vB = [], [], [], []
    for r in ranks:
        bound_a = 1.0 / math.sqrt(r)  # kaiming_uniform(a=sqrt(5)) on (H, r)
        a_k = jax.random.uniform(ks[i], (hidden_size, r), jnp.float32,
                                 -bound_a, bound_a); i += 1
        b_k = 0.02 * jax.random.normal(ks[i], (r, hidden_size), jnp.float32); i += 1
        a_v = jax.random.uniform(ks[i], (hidden_size, r), jnp.float32,
                                 -bound_a, bound_a); i += 1
        b_v = 0.02 * jax.random.normal(ks[i], (r, hidden_size), jnp.float32); i += 1
        kA.append(a_k); kB.append(b_k); vA.append(a_v); vB.append(b_v)

    # raw per-rank weights (reference path)
    for r_idx in range(len(ranks)):
        params[f"key_A_{r_idx}"] = kA[r_idx]
        params[f"key_B_{r_idx}"] = kB[r_idx]
        params[f"value_A_{r_idx}"] = vA[r_idx]
        params[f"value_B_{r_idx}"] = vB[r_idx]

    # zero-padded + stacked weights (kernel path), built once
    rp = max(r_pad, ((max(ranks) + 127) // 128) * 128)

    def pad_a(a):
        return jnp.pad(a, ((0, 0), (0, rp - a.shape[1])))

    def pad_b(b):
        return jnp.pad(b, ((0, rp - b.shape[0]), (0, 0)))

    params["key_A_stack"] = jnp.stack([pad_a(a) for a in kA])      # [NR, H, RP]
    params["key_B_stack"] = jnp.stack([pad_b(b) for b in kB])      # [NR, RP, H]
    params["value_A_stack"] = jnp.stack([pad_a(a) for a in vA])
    params["value_B_stack"] = jnp.stack([pad_b(b) for b in vB])

    # attention_proj MLP
    hh = hidden_size // 2
    b1 = 1.0 / math.sqrt(hidden_size)
    b2 = 1.0 / math.sqrt(hh)
    params["proj_w1"] = jax.random.uniform(ks[i], (hidden_size, hh), jnp.float32, -b1, b1); i += 1
    params["proj_b1"] = jax.random.uniform(ks[i], (1, hh), jnp.float32, -b1, b1); i += 1
    params["proj_w2"] = jax.random.uniform(ks[i], (hh, 1), jnp.float32, -b2, b2); i += 1
    params["proj_b2"] = jax.random.uniform(ks[i], (1, 1), jnp.float32, -b2, b2); i += 1
    params["proj_w2t"] = params["proj_w2"].T              # [1, Hh] for VPU reduce
    params["proj_b2_smem"] = params["proj_b2"].reshape(1)  # [1] for SMEM
    return params


def prepare_kernel_weights(params, dtype):
    """Cast the padded, stacked LoRA weights to the compute dtype ONCE
    (hoisted out of the per-call forward; scale is applied in-kernel in f32)."""
    return {
        "key_A": params["key_A_stack"].astype(dtype),
        "key_B": params["key_B_stack"].astype(dtype),
        "value_A": params["value_A_stack"].astype(dtype),
        "value_B": params["value_B_stack"].astype(dtype),
    }


# ----------------------------------------------------------------------------
# Forward (wrapper around the Pallas kernels)
# ----------------------------------------------------------------------------
def lora_plus_forward(params, kernel_weights, keys, values, ranks, alpha=16.0,
                      importance_thresholds=(0.3, 0.7), residual_scale=1.0,
                      row_tile=None, seq_tile=None):
    B, S, H = keys.shape
    scaling = alpha / float(max(ranks))   # self.scaling = alpha / max(ranks)

    # importance = attention_proj(keys.mean(dim=1)) -> [B, 1]
    xm = keys_mean(keys, seq_tile=seq_tile)
    importance = importance_apply(xm, params["proj_w1"], params["proj_b1"],
                                  params["proj_w2t"], params["proj_b2_smem"])

    # adaptive rank selection.  PyTorch: first i with avg < thresholds[i],
    # else len(ranks)-1  ==  count of (sorted) thresholds with avg >= thr.
    avg_imp = jnp.mean(importance)
    thr = jnp.asarray(importance_thresholds, jnp.float32)
    rank_idx = jnp.minimum(jnp.sum((avg_imp >= thr).astype(jnp.int32)),
                           len(ranks) - 1).reshape(1)

    # residual_scale buffer is read BEFORE its no_grad update -> 1.0 on a
    # fresh module.  Scale goes to SMEM and is applied in-kernel in f32.
    scale = jnp.asarray([scaling * residual_scale], jnp.float32)

    keys_flat = keys.reshape(-1, H)
    values_flat = values.reshape(-1, H)
    ck, cv = lora_kv_apply(rank_idx, scale, keys_flat, values_flat,
                           kernel_weights["key_A"], kernel_weights["key_B"],
                           kernel_weights["value_A"], kernel_weights["value_B"],
                           row_tile=row_tile)

    # TODO(synk): stateful buffer updates (key_cache/value_cache means,
    # sample_count, rank_usage, residual_scale clamp) are module side-state,
    # not forward outputs; omitted here.
    return ck.reshape(B, S, H), cv.reshape(B, S, H)


# ----------------------------------------------------------------------------
# Pure-JAX reference for verification
# ----------------------------------------------------------------------------
def reference_forward(params, keys, values, ranks, alpha=16.0,
                      importance_thresholds=(0.3, 0.7), residual_scale=1.0):
    B, S, H = keys.shape
    scaling = alpha / float(max(ranks))
    keys = keys.astype(jnp.float32)
    values = values.astype(jnp.float32)
    xm = jnp.mean(keys, axis=1)
    h = jnp.maximum(xm @ params["proj_w1"] + params["proj_b1"], 0.0)
    importance = jax.nn.sigmoid(h @ params["proj_w2"] + params["proj_b2"])
    avg = float(jnp.mean(importance))
    rank_idx = len(ranks) - 1
    for i, t in enumerate(importance_thresholds):
        if avg < t:
            rank_idx = i
            break
    kA, kB = params[f"key_A_{rank_idx}"], params[f"key_B_{rank_idx}"]
    vA, vB = params[f"value_A_{rank_idx}"], params[f"value_B_{rank_idx}"]
    kf = keys.reshape(-1, H)
    vf = values.reshape(-1, H)
    s = scaling * residual_scale
    ck = kf + (kf @ kA) @ kB * s
    cv = vf + (vf @ vA) @ vB * s
    return ck.reshape(B, S, H), cv.reshape(B, S, H)


# ----------------------------------------------------------------------------
if __name__ == "__main__":
    B, S, H = 2, 8, 128          # H multiple of 128 -> lane-dense tiles/stores
    ranks = [4, 8, 16]

    root = jax.random.PRNGKey(0)
    k_param, k_keys, k_vals, k_keys2, k_vals2 = jax.random.split(root, 5)
    params = make_params(k_param, H, ranks)

    # --- f32 path: single-tile grids, numerical check -----------------------
    keys_f32 = jax.random.normal(k_keys, (B, S, H), jnp.float32)
    vals_f32 = jax.random.normal(k_vals, (B, S, H), jnp.float32)
    kw_f32 = prepare_kernel_weights(params, jnp.float32)

    ck, cv = lora_plus_forward(params, kw_f32, keys_f32, vals_f32, ranks)
    jax.block_until_ready((ck, cv))
    ck_ref, cv_ref = reference_forward(params, keys_f32, vals_f32, ranks)
    assert ck.shape == (B, S, H) and cv.shape == (B, S, H)
    # tolerance accounts for MXU f32 matmul pass differences vs XLA default
    assert jnp.allclose(ck, ck_ref, atol=5e-3, rtol=5e-3)
    assert jnp.allclose(cv, cv_ref, atol=5e-3, rtol=5e-3)

    # --- bf16 path: production dtype, multi-step grids -----------------------
    B2, S2 = 2, 32
    keys_bf = jax.random.normal(k_keys2, (B2, S2, H), jnp.float32).astype(jnp.bfloat16)
    vals_bf = jax.random.normal(k_vals2, (B2, S2, H), jnp.float32).astype(jnp.bfloat16)
    kw_bf16 = prepare_kernel_weights(params, jnp.bfloat16)

    # small explicit tiles force multi-step row / seq grids (pipelining path)
    ck_b, cv_b = lora_plus_forward(params, kw_bf16, keys_bf, vals_bf, ranks,
                                   row_tile=16, seq_tile=8)
    jax.block_until_ready((ck_b, cv_b))
    ck_rb, cv_rb = reference_forward(params, keys_bf, vals_bf, ranks)
    assert ck_b.dtype == jnp.bfloat16 and cv_b.dtype == jnp.bfloat16
    assert jnp.allclose(ck_b.astype(jnp.float32), ck_rb, atol=3e-2, rtol=3e-2)
    assert jnp.allclose(cv_b.astype(jnp.float32), cv_rb, atol=3e-2, rtol=3e-2)

    print("KERNEL_OK")
</pallas_src>

<mosaic_0001>
module attributes {stable_mosaic.version = 11 : i64} {
  func.func @_keys_mean_kernel(%arg0: i32, %arg1: memref<2x8x128xf32, #tpu.memory_space<vmem>>, %arg2: memref<2x128xf32, #tpu.memory_space<vmem>>, %arg3: memref<2x128xf32, #tpu.memory_space<vmem>>) attributes {dimension_semantics = [#tpu.dimension_semantics<arbitrary>], iteration_bounds = array<i64: 1>, scalar_prefetch = 0 : i64, scratch_operands = 1 : i64, tpu.core_type = #tpu.core_type<tc>, window_params = [{transform_indices = @transform_0, window_bounds = array<i64: 2, 8, 128>}, {pipeline_mode = #tpu.pipeline_mode<synchronous>, transform_indices = @transform_1, window_bounds = array<i64: 2, 128>}]} {
    %c0_i32 = arith.constant 0 : i32
    %0 = arith.cmpi eq, %arg0, %c0_i32 : i32
    %1 = arith.extui %0 : i1 to i32
    %c0_i32_0 = arith.constant 0 : i32
    %2 = arith.cmpi ne, %1, %c0_i32_0 : i32
    scf.if %2 {
      %cst_11 = arith.constant 0.000000e+00 : f32
      %19 = vector.broadcast %cst_11 : f32 to vector<2x128xf32>
      %c0_12 = arith.constant 0 : index
      %c0_13 = arith.constant 0 : index
      %20 = vector.load %arg3[%c0_12, %c0_13] : memref<2x128xf32, #tpu.memory_space<vmem>>, vector<2x128xf32>
      tpu.vector_store %arg3[%c0_12, %c0_13], %19 {strides = array<i32>} : memref<2x128xf32, #tpu.memory_space<vmem>>, vector<2x128xf32>,
    } else {
    }
    %c0 = arith.constant 0 : index
    %c0_1 = arith.constant 0 : index
    %c0_2 = arith.constant 0 : index
    %3 = vector.load %arg1[%c0, %c0_1, %c0_2] : memref<2x8x128xf32, #tpu.memory_space<vmem>>, vector<2x8x128xf32>
    %4 = tpu.iota {dimensions = array<i32: 1>} : vector<2x8x128xi32>
    %c8_i32 = arith.constant 8 : i32
    %5 = arith.muli %arg0, %c8_i32 : i32
    %6 = vector.broadcast %5 : i32 to vector<2x8x128xi32>
    %7 = arith.addi %4, %6 : vector<2x8x128xi32>
    %c8_i32_3 = arith.constant 8 : i32
    %8 = vector.broadcast %c8_i32_3 : i32 to vector<2x8x128xi32>
    %9 = arith.cmpi slt, %7, %8 : vector<2x8x128xi32>
    %cst = arith.constant 0.000000e+00 : f32
    %10 = vector.broadcast %cst : f32 to vector<2x8x128xf32>
    %11 = arith.select %9, %3, %10 : vector<2x8x128xi1>, vector<2x8x128xf32>
    %c0_4 = arith.constant 0 : index
    %c0_5 = arith.constant 0 : index
    %12 = vector.load %arg3[%c0_4, %c0_5] : memref<2x128xf32, #tpu.memory_space<vmem>>, vector<2x128xf32>
    %cst_6 = arith.constant dense<0.000000e+00> : vector<2x128xf32>
    %13 = vector.multi_reduction <add>, %11, %cst_6 [1] : vector<2x8x128xf32> to vector<2x128xf32>
    %14 = arith.addf %12, %13 : vector<2x128xf32>
    %c0_7 = arith.constant 0 : index
    %c0_8 = arith.constant 0 : index
    %15 = vector.load %arg3[%c0_7, %c0_8] : memref<2x128xf32, #tpu.memory_space<vmem>>, vector<2x128xf32>
    tpu.vector_store %arg3[%c0_7, %c0_8], %14 {strides = array<i32>} : memref<2x128xf32, #tpu.memory_space<vmem>>, vector<2x128xf32>,
    %c0_i32_9 = arith.constant 0 : i32
    %16 = arith.cmpi eq, %arg0, %c0_i32_9 : i32
    %17 = arith.extui %16 : i1 to i32
    %c0_i32_10 = arith.constant 0 : i32
    %18 = arith.cmpi ne, %17, %c0_i32_10 : i32
    scf.if %18 {
      %c0_11 = arith.constant 0 : index
      %c0_12 = arith.constant 0 : index
      %19 = vector.load %arg3[%c0_11, %c0_12] : memref<2x128xf32, #tpu.memory_space<vmem>>, vector<2x128xf32>
      %cst_13 = arith.constant 1.250000e-01 : f32
      %20 = vector.broadcast %cst_13 : f32 to vector<2x128xf32>
      %21 = arith.mulf %19, %20 : vector<2x128xf32>
      %c0_14 = arith.constant 0 : index
      %c0_15 = arith.constant 0 : index
      %22 = vector.load %arg2[%c0_14, %c0_15] : memref<2x128xf32, #tpu.memory_space<vmem>>, vector<2x128xf32>
      tpu.vector_store %arg2[%c0_14, %c0_15], %21 {strides = array<i32>} : memref<2x128xf32, #tpu.memory_space<vmem>>, vector<2x128xf32>,
    } else {
    }
    return
  }
  func.func @transform_0(%arg0: i32) -> (i32, i32, i32) {
    %c0_i32 = arith.constant 0 : i32
    %c0_i32_0 = arith.constant 0 : i32
    %c0_i32_1 = arith.constant 0 : i32
    return %c0_i32, %arg0, %c0_i32_0 : i32, i32, i32
  }
  func.func @transform_1(%arg0: i32) -> (i32, i32) {
    %c0_i32 = arith.constant 0 : i32
    %c0_i32_0 = arith.constant 0 : i32
    %c0_i32_1 = arith.constant 0 : i32
    return %c0_i32, %c0_i32_0 : i32, i32
  }
}

</mosaic_0001>

<llo_original>
// kernel: tpu_custom_call.1
$region0: #{tpu_custom_call.1}
  #allocation0 [shape = 'u32[]', space=smem, size = 0x4, offset = 0x4, fixed_abs, tag = 'smem constant byte address 0x4 - core index']
  #allocation1 [shape = 'u32[144,128]{1,0:T(1,128)}', space=vmem, size = 0x12000, scoped, tag = 'internal scratch']
  #allocation2 [shape = 'f32[2,128]{1,0:T(2,128)}', space=vmem, size = 0x400, scoped, tag = 'scratch operand']
  %s0 = inlined_call_operand.hbm [shape: f32[2,8,128], index: 0, kind: input, shape index: {}]
  %s1 = inlined_call_operand.hbm [shape: f32[2,128], index: 1, kind: output, shape index: {}]
  %s2 = sld [smem:[#allocation0]]
  $region26: #{tpu_custom_call.1} parent=0
    _
  %s4 = ssub.s32 1, %s2
  %s5 = scalar_select 0, %s4, %s2
  $region1: #{tpu_custom_call.1} parent=0
    #allocation3 [shape = 'u8[8192]{0}', space=vmem, size = 0x2000, scoped, tag = 'input window, operand 0, single buffered']
    #allocation4 [shape = 's32[1]{0}', space=sflag, size = 0x4, scoped, tag = 'scoped memory for tpu_custom_call.1']
    #allocation5 [shape = 's32[1]{0}', space=sflag, size = 0x4, scoped, tag = 'scoped memory for tpu_custom_call.1']
    #allocation6 [shape = 'u8[1024]{0}', space=vmem, size = 0x400, scoped, tag = 'output window, operand 0, single buffered']
    %6 = vsyncpa [#allocation4], 0
    %7 = vsyncpa [#allocation5], 0
    // Predicated region
    $region2: #{tpu_custom_call.1} parent=1 // pred_check
      _
    $region3: #{tpu_custom_call.1} parent=1 // pred_check_branch
      %9 = sbr.rel (0) target = $region5
    $region4: #{tpu_custom_call.1} parent=1 // pred_region
      %s11 = ssub.s32 256, 256
      %12 = vsyncadd [#allocation4], %s11
      %s13 = sshll.u32 [#allocation3], 4
      %s14 = int_to_ptr.vmem [resolvable:$true] %s13
      %19 = dma.hbm_to_vmem [thread:$0]  %s0, 256, %s14, [#allocation4], 128, 128, 8
    $region5: #{tpu_custom_call.1} parent=1 // pred_fallthru
      _
    // Predicated region
    $region6: #{tpu_custom_call.1} parent=1 // pred_check
      _
    $region7: #{tpu_custom_call.1} parent=1 // pred_check_branch
      %21 = sbr.rel (0) target = $region9
    $region8: #{tpu_custom_call.1} parent=1 // pred_region
      %22 = dma.done [#allocation4], 256
    $region9: #{tpu_custom_call.1} parent=1 // pred_fallthru
      _
    %p23 = scmp.eq.s32.totalorder 0, 0
    // Predicated region
    $region10: #{tpu_custom_call.1} parent=1 // pred_check
      %p24 = pneg %p23
    $region11: #{tpu_custom_call.1} parent=1 // pred_check_branch
      %26 = sbr.rel (%p24) target = $region13
    $region12: #{tpu_custom_call.1} parent=1 // pred_region
      %27 = vst [vmem:[#allocation2] sm:$0x3] 0.0
    $region13: #{tpu_custom_call.1} parent=1 // pred_fallthru
      _
    %v28 = vld [vmem:[#allocation3] sm:$0xff]
    %v29 = vld [vmem:[#allocation3 + $0x8] sm:$0xff]
    %v30 = vlaneseq
    %v31 = vshrl.u32 %v30, 7
    %s32 = smul.u32 0, 8
    %v33 = vstv %s32
    %v34 = vadd.s32 %v31, %v33
    %vm35 = vcmp.lt.s32.totalorder %v34, 8
    %v36 = vsel %vm35, %v28, 0.0
    %v37 = vsel %vm35, %v29, 0.0
    %v38 = vld [vmem:[#allocation2] sm:$0x3]
    %v39 = vrot.slane %v36, 4
    %v40 = vadd.f32 %v36, %v39
    %v41 = vrot.slane %v40, 2
    %v42 = vadd.f32 %v40, %v41
    %v43 = vrot.slane %v42, 1
    %v44 = vadd.f32 %v42, %v43
    %v45 = vrot.slane %v37, 4
    %v46 = vadd.f32 %v37, %v45
    %v47 = vrot.slane %v46, 2
    %v48 = vadd.f32 %v46, %v47
    %v49 = vrot.slane %v48, 1
    %v50 = vadd.f32 %v48, %v49
    %vm53 = vcmask 1041409
    %v54 = vsel %vm53, %v50, %v44
    %v56 = vadd.f32 %v38, %v54
    %57 = vst [vmem:[#allocation2] sm:$0x3] %v56
    // Predicated region
    $region14: #{tpu_custom_call.1} parent=1 // pred_check
      %p58 = pneg %p23
    $region15: #{tpu_custom_call.1} parent=1 // pred_check_branch
      %60 = sbr.rel (%p58) target = $region17
    $region16: #{tpu_custom_call.1} parent=1 // pred_region
      %v61 = vld [vmem:[#allocation2] sm:$0x3]
      %v62 = vmul.f32 %v61, 0.125
      %63 = vst [vmem:[#allocation6] sm:$0x3] %v62
    $region17: #{tpu_custom_call.1} parent=1 // pred_fallthru
      _
    // Predicated region
    $region18: #{tpu_custom_call.1} parent=1 // pred_check
      _
    $region19: #{tpu_custom_call.1} parent=1 // pred_check_branch
      %65 = sbr.rel (0) target = $region21
    $region20: #{tpu_custom_call.1} parent=1 // pred_region
      %s67 = ssub.s32 32, 32
      %68 = vsyncadd [#allocation5], %s67
      %s70 = sshll.u32 [#allocation6], 4
      %s71 = int_to_ptr.vmem [resolvable:$true] %s70
      %73 = dma.vmem_to_hbm [thread:$0]  %s71, 32, %s1, [#allocation5]
    $region21: #{tpu_custom_call.1} parent=1 // pred_fallthru
      _
    // Predicated region
    $region22: #{tpu_custom_call.1} parent=1 // pred_check
      _
    $region23: #{tpu_custom_call.1} parent=1 // pred_check_branch
      %75 = sbr.rel (0) target = $region25
    $region24: #{tpu_custom_call.1} parent=1 // pred_region
      %76 = dma.done [#allocation5], 32
    $region25: #{tpu_custom_call.1} parent=1 // pred_fallthru
      _
    %77 = vsyncpa [#allocation4], 1
    %78 = vsyncpa [#allocation5], 1

</llo_original>
